<compile_context>
chip_gen: v6e
topology: v6e:2x2x1
jax: 0.10.0
libtpu: 0.0.40
codegen_flags: <defaults>
</compile_context>

<pallas_src>
import functools

import jax
import jax.numpy as jnp
from jax.experimental import pallas as pl
from jax.experimental.pallas import tpu as pltpu


def _rmsnorm_kernel(x_ref, w_ref, o_ref, *, eps):
    # One fp32 cast, reused for the reduction and the normalized output.
    x_f32 = x_ref[...].astype(jnp.float32)
    variance = jnp.mean(x_f32 * x_f32, axis=-1, keepdims=True)
    inv_rms = jax.lax.rsqrt(variance + eps)          # EUP op (free-ish slot)
    y = x_f32 * inv_rms
    y = y * w_ref[...].astype(jnp.float32)           # (1, hidden) broadcasts over rows
    o_ref[...] = y.astype(o_ref.dtype)


def _vmem_capacity_bytes():
    try:
        return int(pltpu.get_tpu_info().vmem_capacity_bytes)
    except Exception:
        return 64 * 1024 * 1024  # conservative fallback (v7x per-TensorCore VMEM)


def _pick_tile_rows(rows, hidden, in_bytes, out_bytes, vmem_budget_bytes):
    # Per grid step, double-buffered input + output tiles live in VMEM:
    #   2 * tr * hidden * in_bytes + 2 * tr * hidden * out_bytes
    per_row = 2 * hidden * (in_bytes + out_bytes)
    tr = max(8, int(vmem_budget_bytes // max(per_row, 1)))
    tr = min(tr, 1024)                 # diminishing returns past ~1K rows
    tr = max(8, (tr // 8) * 8)         # keep the sublane dim 8-aligned
    rows8 = ((rows + 7) // 8) * 8
    tr = min(tr, rows8)                # never tile past the (padded) problem
    return tr


def rmsnorm(x, weight=None, eps=1e-6):
    """Pallas RMSNorm over the last axis of x.

    x: (..., hidden). weight: (hidden,) or None.
    Output dtype follows the torch module: weight.dtype if weight is
    fp16/bf16, fp32 if weight is fp32 (x * rsqrt promotion), x.dtype if
    weight is None.
    """
    orig_shape = x.shape
    hidden = orig_shape[-1]
    rows = 1
    for d in orig_shape[:-1]:
        rows *= d
    rows = max(rows, 1)

    if weight is None:
        out_dtype = x.dtype
        w2d = jnp.ones((1, hidden), dtype=jnp.float32)  # exact multiply by 1
    else:
        w_dtype = jnp.dtype(weight.dtype)
        out_dtype = w_dtype if w_dtype in (jnp.float16, jnp.bfloat16) else jnp.float32
        w2d = weight.reshape(1, hidden)

    x2d = x.reshape(rows, hidden)

    in_bytes = jnp.dtype(x.dtype).itemsize
    out_bytes = jnp.dtype(out_dtype).itemsize
    vmem_capacity = _vmem_capacity_bytes()
    # ~75% of VMEM for the pipelined tiles: <=48 MiB on v7x, ~96 MiB on v5e/v6e.
    vmem_budget = vmem_capacity * 3 // 4
    tr = _pick_tile_rows(rows, hidden, in_bytes, out_bytes, vmem_budget)

    # Pad rows up to a multiple of the chosen tile instead of shrinking the
    # tile toward 1 row. Pad rows are zeros: rsqrt(0 + eps) stays finite, rows
    # are independent, and the pad is sliced off below.
    rows_padded = ((rows + tr - 1) // tr) * tr
    if rows_padded != rows:
        x2d = jnp.pad(x2d, ((0, rows_padded - rows), (0, 0)))
    grid = rows_padded // tr

    # Explicit VMEM budget (default scoped limit is only 16/32 MiB) while
    # leaving headroom below physical capacity.
    vmem_limit = int(vmem_capacity * 85 // 100)

    out2d = pl.pallas_call(
        functools.partial(_rmsnorm_kernel, eps=eps),
        out_shape=jax.ShapeDtypeStruct((rows_padded, hidden), out_dtype),
        grid_spec=pltpu.PrefetchScalarGridSpec(
            num_scalar_prefetch=0,
            grid=(grid,),
            in_specs=[
                pl.BlockSpec((tr, hidden), lambda i: (i, 0)),
                # Constant block index -> weight stays resident in VMEM.
                pl.BlockSpec((1, hidden), lambda i: (0, 0)),
            ],
            out_specs=pl.BlockSpec((tr, hidden), lambda i: (i, 0)),
        ),
        compiler_params=pltpu.CompilerParams(
            # Lets the row loop shard across both TensorCores on v7x; harmless
            # on single-TC v5e/v6e.
            dimension_semantics=("parallel",),
            vmem_limit_bytes=vmem_limit,
        ),
    )(x2d, w2d)

    if rows_padded != rows:
        out2d = out2d[:rows]
    return out2d.reshape(orig_shape)


def rmsnorm_ref(x, weight=None, eps=1e-6):
    x_f32 = x.astype(jnp.float32)
    variance = jnp.mean(x_f32 * x_f32, axis=-1, keepdims=True)
    y = x_f32 * jax.lax.rsqrt(variance + eps)
    if weight is None:
        return y.astype(x.dtype)
    w_dtype = jnp.dtype(weight.dtype)
    if w_dtype in (jnp.float16, jnp.bfloat16):
        y = y.astype(w_dtype)
    return y * weight


if __name__ == "__main__":
    key = jax.random.PRNGKey(0)
    k1, k2 = jax.random.split(key)

    # Shapes implied by DiT usage: (batch, seq, hidden), normalize over hidden.
    batch, seq, hidden = 2, 8, 32
    x = jax.random.normal(k1, (batch, seq, hidden), dtype=jnp.float32)
    weight = jnp.ones((hidden,), dtype=jnp.float32)  # nn.Parameter(torch.ones(dim))

    out = jax.block_until_ready(rmsnorm(x, weight, eps=1e-6))
    ref = rmsnorm_ref(x, weight, eps=1e-6)
    assert out.shape == x.shape and out.dtype == jnp.float32
    assert jnp.allclose(out, ref, atol=1e-5, rtol=1e-5)

    # bf16 input + row count not a multiple of 8: exercises the padding path
    # (no degenerate tiny tiles) and the fp32-weight -> fp32 output rule.
    x2 = jax.random.normal(k2, (3, 5, hidden), dtype=jnp.bfloat16)
    out2 = jax.block_until_ready(rmsnorm(x2, weight, eps=1e-6))
    ref2 = rmsnorm_ref(x2, weight, eps=1e-6)
    assert out2.shape == x2.shape and out2.dtype == jnp.float32
    assert jnp.allclose(out2, ref2, atol=2e-2, rtol=2e-2)

    print("KERNEL_OK")
</pallas_src>

<mosaic_0001>
module attributes {stable_mosaic.version = 11 : i64} {
  func.func @_rmsnorm_kernel(%arg0: i32, %arg1: memref<16x32xf32, #tpu.memory_space<vmem>>, %arg2: memref<1x32xf32, #tpu.memory_space<vmem>>, %arg3: memref<16x32xf32, #tpu.memory_space<vmem>>) attributes {dimension_semantics = [#tpu.dimension_semantics<parallel>], iteration_bounds = array<i64: 1>, scalar_prefetch = 0 : i64, scratch_operands = 0 : i64, tpu.core_type = #tpu.core_type<tc>, window_params = [{transform_indices = @transform_0, window_bounds = array<i64: 16, 32>}, {pipeline_mode = #tpu.pipeline_mode<synchronous>, transform_indices = @transform_1, window_bounds = array<i64: 1, 32>}, {transform_indices = @transform_2, window_bounds = array<i64: 16, 32>}]} {
    %c0 = arith.constant 0 : index
    %c0_0 = arith.constant 0 : index
    %0 = vector.load %arg1[%c0, %c0_0] : memref<16x32xf32, #tpu.memory_space<vmem>>, vector<16x32xf32>
    %1 = arith.mulf %0, %0 : vector<16x32xf32>
    %cst = arith.constant dense<0.000000e+00> : vector<16xf32>
    %2 = vector.multi_reduction <add>, %1, %cst [1] : vector<16x32xf32> to vector<16xf32>
    %3 = vector.shape_cast %2 : vector<16xf32> to vector<16x1xf32>
    %cst_1 = arith.constant 3.200000e+01 : f32
    %4 = vector.broadcast %cst_1 : f32 to vector<16x1xf32>
    %5 = arith.divf %3, %4 : vector<16x1xf32>
    %cst_2 = arith.constant 9.99999997E-7 : f32
    %6 = vector.broadcast %cst_2 : f32 to vector<16x1xf32>
    %7 = arith.addf %5, %6 : vector<16x1xf32>
    %8 = math.rsqrt %7 : vector<16x1xf32>
    %9 = vector.broadcast %8 : vector<16x1xf32> to vector<16x32xf32>
    %10 = arith.mulf %0, %9 : vector<16x32xf32>
    %c0_3 = arith.constant 0 : index
    %c0_4 = arith.constant 0 : index
    %11 = vector.load %arg2[%c0_3, %c0_4] : memref<1x32xf32, #tpu.memory_space<vmem>>, vector<1x32xf32>
    %12 = vector.broadcast %11 : vector<1x32xf32> to vector<16x32xf32>
    %13 = arith.mulf %10, %12 : vector<16x32xf32>
    %c0_5 = arith.constant 0 : index
    %c0_6 = arith.constant 0 : index
    %14 = vector.load %arg3[%c0_5, %c0_6] : memref<16x32xf32, #tpu.memory_space<vmem>>, vector<16x32xf32>
    tpu.vector_store %arg3[%c0_5, %c0_6], %13 {strides = array<i32>} : memref<16x32xf32, #tpu.memory_space<vmem>>, vector<16x32xf32>,
    return
  }
  func.func @transform_0(%arg0: i32) -> (i32, i32) {
    %c0_i32 = arith.constant 0 : i32
    %c0_i32_0 = arith.constant 0 : i32
    return %arg0, %c0_i32 : i32, i32
  }
  func.func @transform_1(%arg0: i32) -> (i32, i32) {
    %c0_i32 = arith.constant 0 : i32
    %c0_i32_0 = arith.constant 0 : i32
    %c0_i32_1 = arith.constant 0 : i32
    return %c0_i32, %c0_i32_0 : i32, i32
  }
  func.func @transform_2(%arg0: i32) -> (i32, i32) {
    %c0_i32 = arith.constant 0 : i32
    %c0_i32_0 = arith.constant 0 : i32
    return %arg0, %c0_i32 : i32, i32
  }
}

</mosaic_0001>

<llo_original>
// kernel: tpu_custom_call.1
$region0: #{tpu_custom_call.1}
  #allocation0 [shape = 'u32[]', space=smem, size = 0x4, offset = 0x4, fixed_abs, tag = 'smem constant byte address 0x4 - core index']
  #allocation1 [shape = 'u32[144,128]{1,0:T(1,128)}', space=vmem, size = 0x12000, scoped, tag = 'internal scratch']
  %s0 = inlined_call_operand.hbm [shape: f32[16,32], index: 0, kind: input, shape index: {}]
  %s1 = inlined_call_operand.vmem [shape: f32[1,32], index: 1, kind: input, shape index: {}]
  %s2 = inlined_call_operand.hbm [shape: f32[16,32], index: 2, kind: output, shape index: {}]
  %s3 = sld [smem:[#allocation0]]
  $region22: #{tpu_custom_call.1} parent=0
    _
  %s5 = ssub.s32 1, %s3
  %s6 = scalar_select 0, %s5, %s3
  $region1: #{tpu_custom_call.1} parent=0
    #allocation2 [shape = 'u8[8192]{0}', space=vmem, size = 0x2000, scoped, tag = 'input window, operand 0, single buffered']
    #allocation3 [shape = 's32[1]{0}', space=sflag, size = 0x4, scoped, tag = 'scoped memory for tpu_custom_call.1']
    #allocation4 [shape = 's32[1]{0}', space=sflag, size = 0x4, scoped, tag = 'scoped memory for tpu_custom_call.1']
    #allocation5 [shape = 'u8[8192]{0}', space=vmem, size = 0x2000, scoped, tag = 'output window, operand 0, single buffered']
    %7 = vsyncpa [#allocation3], 0
    %8 = vsyncpa [#allocation4], 0
    // Predicated region
    $region2: #{tpu_custom_call.1} parent=1 // pred_check
      _
    $region3: #{tpu_custom_call.1} parent=1 // pred_check_branch
      %10 = sbr.rel (0) target = $region5
    $region4: #{tpu_custom_call.1} parent=1 // pred_region
      %s12 = ssub.s32 256, 256
      %13 = vsyncadd [#allocation3], %s12
      %s14 = sshll.u32 [#allocation2], 4
      %s15 = int_to_ptr.vmem [resolvable:$true] %s14
      %20 = dma.hbm_to_vmem [thread:$0]  %s0, 256, %s15, [#allocation3], 128, 128, 8
    $region5: #{tpu_custom_call.1} parent=1 // pred_fallthru
      _
    // Predicated region
    $region6: #{tpu_custom_call.1} parent=1 // pred_check
      _
    $region7: #{tpu_custom_call.1} parent=1 // pred_check_branch
      %22 = sbr.rel (0) target = $region9
    $region8: #{tpu_custom_call.1} parent=1 // pred_region
      _
    $region9: #{tpu_custom_call.1} parent=1 // pred_fallthru
      _
    // Predicated region
    $region10: #{tpu_custom_call.1} parent=1 // pred_check
      _
    $region11: #{tpu_custom_call.1} parent=1 // pred_check_branch
      %24 = sbr.rel (0) target = $region13
    $region12: #{tpu_custom_call.1} parent=1 // pred_region
      %25 = dma.done [#allocation3], 256
    $region13: #{tpu_custom_call.1} parent=1 // pred_fallthru
      _
    %v26 = vld [vmem:[#allocation2] sm:$0xff]
    %v27 = vld [vmem:[#allocation2 + $0x8] sm:$0xff]
    %v28 = vmul.f32 %v26, %v26
    %v29 = vmul.f32 %v27, %v27
    %vm30 = vcmask 261120
    %v31 = vsel %vm30, %v28, 0.0
    %32 = vadd.xlane.f32.xlu0 %v31
    %v33 = vpop.xlane.xlu0 %32
    %v34 = vsel %vm30, %v29, 0.0
    %35 = vadd.xlane.f32.xlu0 %v34
    %v36 = vpop.xlane.xlu0 %35
    %v37 = vrcp.pop 32.0
    %v38 = vmul.f32 %v33, %v37
    %v39 = vmul.f32 %v36, %v37
    %v40 = vadd.f32 %v38, 1e-06
    %v41 = vadd.f32 %v39, 1e-06
    %v42 = vrsqrt.pop %v40
    %v43 = vrsqrt.pop %v41
    %v44 = vmul.f32 %v26, %v42
    %v45 = vmul.f32 %v27, %v43
    %v46 = vld [vmem:[%s1] sm:$0x1]
    %v48 = vlaneseq
    %v49 = vshrl.u32 %v48, 7
    %v50 = vsub.s32 0, %v49
    %v51 = vrot.slane %v46, %v50
    %v53 = vmul.f32 %v44, %v51
    %v54 = vmul.f32 %v45, %v51
    %55 = vst.msk [vmem:[#allocation5] sm:$0xff] %vm30, %v53
    %56 = vst.msk [vmem:[#allocation5 + $0x8] sm:$0xff] %vm30, %v54
    // Predicated region
    $region14: #{tpu_custom_call.1} parent=1 // pred_check
      _
    $region15: #{tpu_custom_call.1} parent=1 // pred_check_branch
      %58 = sbr.rel (0) target = $region17
    $region16: #{tpu_custom_call.1} parent=1 // pred_region
      %s60 = ssub.s32 256, 256
      %61 = vsyncadd [#allocation4], %s60
      %s62 = sshll.u32 [#allocation5], 4
      %s63 = int_to_ptr.vmem [resolvable:$true] %s62
      %68 = dma.vmem_to_hbm [thread:$0]  %s63, 256, %s2, [#allocation4], 128, 128, 8
    $region17: #{tpu_custom_call.1} parent=1 // pred_fallthru
      _
    // Predicated region
    $region18: #{tpu_custom_call.1} parent=1 // pred_check
      _
    $region19: #{tpu_custom_call.1} parent=1 // pred_check_branch
      %70 = sbr.rel (0) target = $region21
    $region20: #{tpu_custom_call.1} parent=1 // pred_region
      %71 = dma.done [#allocation4], 256
    $region21: #{tpu_custom_call.1} parent=1 // pred_fallthru
      _
    %72 = vsyncpa [#allocation3], 1
    %73 = vsyncpa [#allocation4], 1

</llo_original>
